<compile_context>
chip_gen: v6e
topology: v6e:2x2x1
jax: 0.10.0
libtpu: 0.0.40
codegen_flags: <defaults>
</compile_context>

<pallas_src>
import functools

import jax
import jax.numpy as jnp
from jax.experimental import pallas as pl
from jax.experimental.pallas import tpu as pltpu


def _round_up(x: int, m: int) -> int:
    return (x + m - 1) // m * m


def _default_vmem_limit() -> int:
    """~13/16 of physical VMEM: ~52 MiB on v7x (64 MiB), ~104 MiB on v5e/v6e."""
    phys = 64 * 1024 * 1024
    try:
        info = pltpu.get_tpu_info()
        phys = int(getattr(info, "vmem_capacity_bytes", phys))
    except Exception:
        pass
    return (phys // 16) * 13


def _maybe_single_buffered(block_shape, index_map):
    """Constant-index operand: request a single VMEM buffer (never refetched)."""
    try:
        return pl.BlockSpec(block_shape, index_map, pipeline_mode=pl.Buffered(1))
    except TypeError:  # older BlockSpec without pipeline_mode
        return pl.BlockSpec(block_shape, index_map)


def _lora_kernel(x_ref, wd_ref, wu_ref, *rest, compute_dtype, with_bias, precision):
    # x_ref:  (tm, Fin)    token tile, original activation dtype
    # wd_ref: (Fin, r_p)   down.weight^T, rank zero-padded, compute dtype
    # wu_ref: (r_p, tn)    up.weight^T * (alpha/rank), rank zero-padded
    # b_ref:  (1, tn)      bias * (alpha/rank), f32         [only if with_bias]
    # o_ref:  (tm, tn)
    # t_ref:  (tm, r_p)    VMEM scratch holding the down projection
    if with_bias:
        b_ref, o_ref, t_ref = rest
    else:
        o_ref, t_ref = rest

    # Down projection only once per M tile (j == 0); the result is reused for
    # every Fout tile j.  Per-tile cast in VMEM keeps HBM traffic in the
    # original activation dtype.
    @pl.when(pl.program_id(1) == 0)
    def _():
        x = x_ref[...].astype(compute_dtype)
        t_ref[...] = jnp.dot(
            x, wd_ref[...], preferred_element_type=jnp.float32,
            precision=precision).astype(compute_dtype)

    # Up projection (MXU), scale already folded into wu; f32 accumulation.
    y = jnp.dot(t_ref[...], wu_ref[...], preferred_element_type=jnp.float32,
                precision=precision)
    if with_bias:
        y = y + b_ref[...]
    o_ref[...] = y.astype(o_ref.dtype)


def prepare_lora_weights(down_weight, up_weight, bias=None,
                         network_alpha=None, rank=None):
    """One-time per-layer prep: transpose, fold alpha/rank, pad rank to 128.

    down_weight: (rank, in_features)   nn.Linear weight layout
    up_weight:   (out_features, rank)
    bias:        (1, 1, out_features) or None
    Returns (wd_t, wu_t, b2) ready for lora_linear_apply.
    """
    compute_dtype = down_weight.dtype
    r, fin = down_weight.shape
    fout = up_weight.shape[0]
    if rank is None:
        rank = r
    scale = 1.0 if network_alpha is None else float(network_alpha) / float(rank)

    r_p = _round_up(r, 128)  # full MXU lane tile for both matmuls
    wd_t = jnp.zeros((fin, r_p), compute_dtype).at[:, :r].set(
        down_weight.T.astype(compute_dtype))
    wu_scaled = (up_weight.astype(jnp.float32).T
                 * jnp.float32(scale)).astype(compute_dtype)
    wu_t = jnp.zeros((r_p, fout), compute_dtype).at[:r, :].set(wu_scaled)

    b2 = None
    if bias is not None:
        b2 = bias.reshape(1, fout).astype(jnp.float32) * jnp.float32(scale)
    return wd_t, wu_t, b2


def lora_linear_apply(hidden_states, wd_t, wu_t, b2=None, *,
                      tile_m=256, tile_n=512, vmem_limit_bytes=None):
    """Apply the fused LoRA kernel with pre-prepared weights.

    hidden_states: (B, S, in_features), any float dtype.
    Output matches LoRALinearLayerwBias.forward (cast back to input dtype).
    """
    orig_dtype = hidden_states.dtype
    compute_dtype = wd_t.dtype

    B, S, fin = hidden_states.shape
    fin_w, r_p = wd_t.shape
    assert fin_w == fin, (fin_w, fin)
    fout = wu_t.shape[1]
    with_bias = b2 is not None
    M = B * S

    # ---- tile sizes (no activation/output padding; cdiv grid masks partials)
    tm = int(tile_m)
    if M <= tm:
        tm = _round_up(M, 8)              # single M step
    else:
        tm = max(8, (tm // 8) * 8)
    tn = int(tile_n)
    if fout <= tn:
        tn = fout                         # single Fout step (full-dim block)
    else:
        tn = max(128, (tn // 128) * 128)  # lane-dense output stores

    grid = (pl.cdiv(M, tm), pl.cdiv(fout, tn))  # i outer, j inner -> x resident

    x2 = hidden_states.reshape(M, fin)          # free reshape, no copy/pad

    precision = (jax.lax.Precision.HIGHEST
                 if compute_dtype == jnp.float32 else None)

    in_specs = [
        # TODO(synk): on v7x, bump x to pipeline_mode=pl.Buffered(3) if a
        # profile shows exposed per-step DMA.
        pl.BlockSpec((tm, fin), lambda i, j: (i, 0)),               # x tile
        _maybe_single_buffered((fin, r_p), lambda i, j: (0, 0)),    # Wd^T (resident)
        pl.BlockSpec((r_p, tn), lambda i, j: (0, j)),               # Wu^T * scale
    ]
    args = [x2, wd_t, wu_t]
    if with_bias:
        in_specs.append(pl.BlockSpec((1, tn), lambda i, j: (0, j)))
        args.append(b2)

    if vmem_limit_bytes is None:
        vmem_limit_bytes = _default_vmem_limit()

    out2 = pl.pallas_call(
        functools.partial(_lora_kernel, compute_dtype=compute_dtype,
                          with_bias=with_bias, precision=precision),
        out_shape=jax.ShapeDtypeStruct((M, fout), orig_dtype),
        grid_spec=pltpu.PrefetchScalarGridSpec(
            num_scalar_prefetch=0,
            grid=grid,
            in_specs=in_specs,
            out_specs=pl.BlockSpec((tm, tn), lambda i, j: (i, j)),
            scratch_shapes=[pltpu.VMEM((tm, r_p), compute_dtype)],
        ),
        compiler_params=pltpu.CompilerParams(
            dimension_semantics=("parallel", "parallel"),
            vmem_limit_bytes=int(vmem_limit_bytes),
        ),
    )(*args)

    return out2.reshape(B, S, fout)


def lora_linear_w_bias(hidden_states, down_weight, up_weight, bias=None,
                       network_alpha=None, rank=None, **kwargs):
    """Convenience wrapper: prepare weights + apply (prefer hoisting prep)."""
    wd_t, wu_t, b2 = prepare_lora_weights(down_weight, up_weight, bias,
                                          network_alpha, rank)
    return lora_linear_apply(hidden_states, wd_t, wu_t, b2, **kwargs)


def reference_lora(hidden_states, down_weight, up_weight, bias, network_alpha, rank):
    """Plain-JAX reference mirroring the PyTorch forward."""
    orig_dtype = hidden_states.dtype
    dtype = down_weight.dtype
    x = hidden_states.astype(dtype)
    down = x @ down_weight.T
    up = down @ up_weight.T
    if bias is not None:
        up = up + bias.reshape(1, 1, -1)
    if network_alpha is not None:
        up = up * (network_alpha / rank)
    return up.astype(orig_dtype)


if __name__ == "__main__":
    key = jax.random.PRNGKey(0)

    # ---- test 1: module-consistent small shapes, with bias + network_alpha --
    in_features, out_features, rank, network_alpha = 32, 32, 4, 8.0
    B, S = 2, 8
    kx, kd, ku, kb, key = jax.random.split(key, 5)

    hidden_states = jax.random.normal(kx, (B, S, in_features), dtype=jnp.float32)
    # Note: the PyTorch module zero-inits `up`, which would make the forward
    # trivially bias-only; use small random values so the math is exercised.
    down_weight = (1.0 / rank) * jax.random.normal(
        kd, (rank, in_features), dtype=jnp.float32)
    up_weight = 0.02 * jax.random.normal(
        ku, (out_features, rank), dtype=jnp.float32)
    bias = 0.01 * jax.random.normal(kb, (1, 1, out_features), dtype=jnp.float32)

    wd_t, wu_t, b2 = prepare_lora_weights(down_weight, up_weight, bias,
                                          network_alpha, rank)
    out = lora_linear_apply(hidden_states, wd_t, wu_t, b2)
    out = jax.block_until_ready(out)
    ref = reference_lora(hidden_states, down_weight, up_weight, bias,
                         network_alpha, rank)
    assert out.shape == (B, S, out_features), out.shape
    assert out.dtype == hidden_states.dtype
    assert jnp.allclose(out, ref, atol=1e-4, rtol=1e-4), "mismatch vs reference (t1)"

    # ---- test 2: non-aligned dims + partial M/Fout tiles, no bias/alpha -----
    in2, out2_f, rank2 = 160, 384, 4
    B2, S2 = 2, 300                      # M = 600, not a multiple of tile_m
    kx2, kd2, ku2, key = jax.random.split(key, 4)
    hs2 = jax.random.normal(kx2, (B2, S2, in2), dtype=jnp.float32)
    dw2 = (1.0 / rank2) * jax.random.normal(kd2, (rank2, in2), dtype=jnp.float32)
    uw2 = 0.02 * jax.random.normal(ku2, (out2_f, rank2), dtype=jnp.float32)

    wd2, wu2, _ = prepare_lora_weights(dw2, uw2, None, None, rank2)
    o2 = lora_linear_apply(hs2, wd2, wu2, None, tile_m=256, tile_n=128)
    o2 = jax.block_until_ready(o2)
    r2 = reference_lora(hs2, dw2, uw2, None, None, rank2)
    assert o2.shape == (B2, S2, out2_f), o2.shape
    assert jnp.allclose(o2, r2, atol=1e-4, rtol=1e-4), "mismatch vs reference (t2)"

    print("KERNEL_OK")
</pallas_src>

<mosaic_0001>
module attributes {stable_mosaic.version = 11 : i64} {
  func.func @_lora_kernel(%arg0: i32, %arg1: i32, %arg2: memref<16x32xf32, #tpu.memory_space<vmem>>, %arg3: memref<32x128xf32, #tpu.memory_space<vmem>>, %arg4: memref<128x32xf32, #tpu.memory_space<vmem>>, %arg5: memref<1x32xf32, #tpu.memory_space<vmem>>, %arg6: memref<16x32xf32, #tpu.memory_space<vmem>>, %arg7: memref<16x128xf32, #tpu.memory_space<vmem>>) attributes {dimension_semantics = [#tpu.dimension_semantics<parallel>, #tpu.dimension_semantics<parallel>], iteration_bounds = array<i64: 1, 1>, scalar_prefetch = 0 : i64, scratch_operands = 1 : i64, tpu.core_type = #tpu.core_type<tc>, window_params = [{transform_indices = @transform_0, window_bounds = array<i64: 16, 32>}, {pipeline_mode = #tpu.pipeline_mode<synchronous>, transform_indices = @transform_1, window_bounds = array<i64: 32, 128>}, {transform_indices = @transform_2, window_bounds = array<i64: 128, 32>}, {transform_indices = @transform_3, window_bounds = array<i64: 1, 32>}, {transform_indices = @transform_4, window_bounds = array<i64: 16, 32>}]} {
    %c0_i32 = arith.constant 0 : i32
    %0 = arith.cmpi eq, %arg1, %c0_i32 : i32
    %1 = arith.extui %0 : i1 to i32
    %c0_i32_0 = arith.constant 0 : i32
    %2 = arith.cmpi ne, %1, %c0_i32_0 : i32
    scf.if %2 {
      %c0_8 = arith.constant 0 : index
      %c0_9 = arith.constant 0 : index
      %10 = vector.load %arg2[%c0_8, %c0_9] : memref<16x32xf32, #tpu.memory_space<vmem>>, vector<16x32xf32>
      %c0_10 = arith.constant 0 : index
      %c0_11 = arith.constant 0 : index
      %11 = vector.load %arg3[%c0_10, %c0_11] : memref<32x128xf32, #tpu.memory_space<vmem>>, vector<32x128xf32>
      %cst_12 = arith.constant dense<0.000000e+00> : vector<16x128xf32>
      %12 = tpu.matmul %10, %11, %cst_12 {dimension_numbers = #tpu.dot_dimension_numbers<[1], [0], [0], [1], [0, 0, 1, 1], [], []>, precision = #tpu.contract_precision<fp32>} : vector<16x32xf32>, vector<32x128xf32>, vector<16x128xf32> -> vector<16x128xf32>
      %c0_13 = arith.constant 0 : index
      %c0_14 = arith.constant 0 : index
      %13 = vector.load %arg7[%c0_13, %c0_14] : memref<16x128xf32, #tpu.memory_space<vmem>>, vector<16x128xf32>
      tpu.vector_store %arg7[%c0_13, %c0_14], %12 {strides = array<i32>} : memref<16x128xf32, #tpu.memory_space<vmem>>, vector<16x128xf32>,
    } else {
    }
    %c0 = arith.constant 0 : index
    %c0_1 = arith.constant 0 : index
    %3 = vector.load %arg7[%c0, %c0_1] : memref<16x128xf32, #tpu.memory_space<vmem>>, vector<16x128xf32>
    %c0_2 = arith.constant 0 : index
    %c0_3 = arith.constant 0 : index
    %4 = vector.load %arg4[%c0_2, %c0_3] : memref<128x32xf32, #tpu.memory_space<vmem>>, vector<128x32xf32>
    %cst = arith.constant dense<0.000000e+00> : vector<16x32xf32>
    %5 = tpu.matmul %3, %4, %cst {dimension_numbers = #tpu.dot_dimension_numbers<[1], [0], [0], [1], [0, 0, 1, 1], [], []>, precision = #tpu.contract_precision<fp32>} : vector<16x128xf32>, vector<128x32xf32>, vector<16x32xf32> -> vector<16x32xf32>
    %c0_4 = arith.constant 0 : index
    %c0_5 = arith.constant 0 : index
    %6 = vector.load %arg5[%c0_4, %c0_5] : memref<1x32xf32, #tpu.memory_space<vmem>>, vector<1x32xf32>
    %7 = vector.broadcast %6 : vector<1x32xf32> to vector<16x32xf32>
    %8 = arith.addf %5, %7 : vector<16x32xf32>
    %c0_6 = arith.constant 0 : index
    %c0_7 = arith.constant 0 : index
    %9 = vector.load %arg6[%c0_6, %c0_7] : memref<16x32xf32, #tpu.memory_space<vmem>>, vector<16x32xf32>
    tpu.vector_store %arg6[%c0_6, %c0_7], %8 {strides = array<i32>} : memref<16x32xf32, #tpu.memory_space<vmem>>, vector<16x32xf32>,
    return
  }
  func.func @transform_0(%arg0: i32, %arg1: i32) -> (i32, i32) {
    %c0_i32 = arith.constant 0 : i32
    %c0_i32_0 = arith.constant 0 : i32
    return %arg0, %c0_i32 : i32, i32
  }
  func.func @transform_1(%arg0: i32, %arg1: i32) -> (i32, i32) {
    %c0_i32 = arith.constant 0 : i32
    %c0_i32_0 = arith.constant 0 : i32
    %c0_i32_1 = arith.constant 0 : i32
    return %c0_i32, %c0_i32_0 : i32, i32
  }
  func.func @transform_2(%arg0: i32, %arg1: i32) -> (i32, i32) {
    %c0_i32 = arith.constant 0 : i32
    %c0_i32_0 = arith.constant 0 : i32
    return %c0_i32, %arg1 : i32, i32
  }
  func.func @transform_3(%arg0: i32, %arg1: i32) -> (i32, i32) {
    %c0_i32 = arith.constant 0 : i32
    %c0_i32_0 = arith.constant 0 : i32
    return %c0_i32, %arg1 : i32, i32
  }
  func.func @transform_4(%arg0: i32, %arg1: i32) -> (i32, i32) {
    %c0_i32 = arith.constant 0 : i32
    return %arg0, %arg1 : i32, i32
  }
}

</mosaic_0001>

<llo_original>
// kernel: tpu_custom_call.1
$region0: #{tpu_custom_call.1}
  #allocation0 [shape = 'u32[]', space=smem, size = 0x4, offset = 0x4, fixed_abs, tag = 'smem constant byte address 0x4 - core index']
  #allocation1 [shape = 'u32[144,128]{1,0:T(1,128)}', space=vmem, size = 0x12000, scoped, tag = 'internal scratch']
  #allocation2 [shape = 'f32[16,128]{1,0:T(8,128)}', space=vmem, size = 0x2000, scoped, tag = 'scratch operand']
  %s0 = inlined_call_operand.vmem [shape: f32[16,32], index: 0, kind: input, shape index: {}]
  %s1 = inlined_call_operand.vmem [shape: f32[32,128], index: 1, kind: input, shape index: {}]
  %s2 = inlined_call_operand.vmem [shape: f32[128,32], index: 2, kind: input, shape index: {}]
  %s3 = inlined_call_operand.vmem [shape: f32[1,32], index: 3, kind: input, shape index: {}]
  %s4 = inlined_call_operand.hbm [shape: f32[16,32], index: 4, kind: output, shape index: {}]
  %s5 = sld [smem:[#allocation0]]
  $region30: #{tpu_custom_call.1} parent=0
    _
  %s7 = ssub.s32 1, %s5
  %s8 = scalar_select 0, %s7, %s5
  $region1: #{tpu_custom_call.1} parent=0
    #allocation3 [shape = 'u8[8192]{0}', space=vmem, size = 0x2000, scoped, tag = 'output window, operand 0, single buffered']
    #allocation4 [shape = 's32[1]{0}', space=sflag, size = 0x4, scoped, tag = 'scoped memory for tpu_custom_call.1']
    %9 = vsyncpa [#allocation4], 0
    // Predicated region
    $region2: #{tpu_custom_call.1} parent=1 // pred_check
      _
    $region3: #{tpu_custom_call.1} parent=1 // pred_check_branch
      %11 = sbr.rel (0) target = $region5
    $region4: #{tpu_custom_call.1} parent=1 // pred_region
      _
    $region5: #{tpu_custom_call.1} parent=1 // pred_fallthru
      _
    // Predicated region
    $region6: #{tpu_custom_call.1} parent=1 // pred_check
      _
    $region7: #{tpu_custom_call.1} parent=1 // pred_check_branch
      %13 = sbr.rel (0) target = $region9
    $region8: #{tpu_custom_call.1} parent=1 // pred_region
      _
    $region9: #{tpu_custom_call.1} parent=1 // pred_fallthru
      _
    // Predicated region
    $region10: #{tpu_custom_call.1} parent=1 // pred_check
      _
    $region11: #{tpu_custom_call.1} parent=1 // pred_check_branch
      %15 = sbr.rel (0) target = $region13
    $region12: #{tpu_custom_call.1} parent=1 // pred_region
      _
    $region13: #{tpu_custom_call.1} parent=1 // pred_fallthru
      _
    // Predicated region
    $region14: #{tpu_custom_call.1} parent=1 // pred_check
      _
    $region15: #{tpu_custom_call.1} parent=1 // pred_check_branch
      %17 = sbr.rel (0) target = $region17
    $region16: #{tpu_custom_call.1} parent=1 // pred_region
      _
    $region17: #{tpu_custom_call.1} parent=1 // pred_fallthru
      _
    %p18 = scmp.eq.s32.totalorder 0, 0
    // Predicated region
    $region18: #{tpu_custom_call.1} parent=1 // pred_check
      %p19 = pneg %p18
    $region19: #{tpu_custom_call.1} parent=1 // pred_check_branch
      %21 = sbr.rel (%p19) target = $region21
    $region20: #{tpu_custom_call.1} parent=1 // pred_region
      %v22 = vld [vmem:[%s0] sm:$0xff]
      %v23 = vld [vmem:[%s0 + $0x8] sm:$0xff]
      %v24 = vld [vmem:[%s1] sm:$0xff]
      %v25 = vld [vmem:[%s1 + $0x8] sm:$0xff]
      %v26 = vld [vmem:[%s1 + $0x10] sm:$0xff]
      %v27 = vld [vmem:[%s1 + $0x18] sm:$0xff]
      %vm28 = vcmask 261120
      %v30 = vsel %vm28, %v22, 0
      %v33 = vsel %vm28, %v23, 0
      %35 = vmatprep.subr.mxu0 0.0
      %36 = vmatpush1.msra.mxu0 0.0
      %37 = vmatprep.subr.mxu0 0.0
      %38 = vmatpush1.msra.mxu0 0.0
      %39 = vmatprep.subr.mxu0 0.0
      %40 = vmatpush1.msra.mxu0 0.0
      %41 = vmatprep.subr.mxu0 0.0
      %42 = vmatpush1.msra.mxu0 0.0
      %43 = vmatprep.subr.mxu0 0.0
      %44 = vmatpush1.msra.mxu0 0.0
      %45 = vmatprep.subr.mxu0 0.0
      %46 = vmatpush1.msra.mxu0 0.0
      %47 = vmatprep.subr.mxu0 0.0
      %48 = vmatpush1.msra.mxu0 0.0
      %49 = vmatprep.subr.mxu0 0.0
      %50 = vmatpush1.msra.mxu0 0.0
      %51 = vmatprep.subr.mxu0 0.0
      %52 = vmatpush1.msra.mxu0 0.0
      %53 = vmatprep.subr.mxu0 0.0
      %54 = vmatpush1.msra.mxu0 0.0
      %55 = vmatprep.subr.mxu0 0.0
      %56 = vmatpush1.msra.mxu0 0.0
      %57 = vmatprep.subr.mxu0 0.0
      %58 = vmatpush1.msra.mxu0 0.0
      %59 = vmatprep.subr.mxu0 0.0
      %v60 = vand.u32 %v27, 4294901760
      %61 = vmatpush1.msra.mxu0 %v60
      %62 = vmatprep.subr.mxu0 0.0
      %v63 = vand.u32 %v26, 4294901760
      %64 = vmatpush1.msra.mxu0 %v63
      %65 = vmatprep.subr.mxu0 0.0
      %v66 = vand.u32 %v25, 4294901760
      %67 = vmatpush1.msra.mxu0 %v66
      %68 = vmatprep.subr.mxu0 0.0
      %v69 = vand.u32 %v24, 4294901760
      %70 = vmatpush1.msra.mxu0 %v69
      %71 = vmatprep.subr.mxu0 0.0
      %72 = vmatpush2.msra.mxu0 0.0
      %73 = vmatprep.subr.mxu0 0.0
      %74 = vmatpush2.msra.mxu0 0.0
      %75 = vmatprep.subr.mxu0 0.0
      %76 = vmatpush2.msra.mxu0 0.0
      %77 = vmatprep.subr.mxu0 0.0
      %78 = vmatpush2.msra.mxu0 0.0
      %79 = vmatprep.subr.mxu0 0.0
      %80 = vmatpush2.msra.mxu0 0.0
      %81 = vmatprep.subr.mxu0 0.0
      %82 = vmatpush2.msra.mxu0 0.0
      %83 = vmatprep.subr.mxu0 0.0
      %84 = vmatpush2.msra.mxu0 0.0
      %85 = vmatprep.subr.mxu0 0.0
      %86 = vmatpush2.msra.mxu0 0.0
      %87 = vmatprep.subr.mxu0 0.0
      %88 = vmatpush2.msra.mxu0 0.0
      %89 = vmatprep.subr.mxu0 0.0
      %90 = vmatpush2.msra.mxu0 0.0
      %91 = vmatprep.subr.mxu0 0.0
      %92 = vmatpush2.msra.mxu0 0.0
      %93 = vmatprep.subr.mxu0 0.0
      %94 = vmatpush2.msra.mxu0 0.0
      %95 = vmatprep.subr.mxu0 0.0
      %96 = vmatpush2.msra.mxu0 0.0
      %97 = vmatprep.subr.mxu0 0.0
      %98 = vmatpush2.msra.mxu0 0.0
      %99 = vmatprep.subr.mxu0 0.0
      %100 = vmatpush2.msra.mxu0 0.0
      %101 = vmatprep.subr.mxu0 0.0
      %102 = vmatpush2.msra.mxu0 0.0
      %103 = vmatprep.mubr.f32.mxu0 0.0
      %v104 = vand.u32 %v30, 4294901760
      %v105 = vsub.f32 %v30, %v104
      %v106 = vand.u32 %v105, 4294901760
      %v107 = vsub.f32 %v105, %v106
      %v108 = vand.u32 %v107, 4294901760
      %109 = vmatmul.mubr.f32.gmra.mxu0 %v108
      %v110 = vpop.f32.mrf.mxu0
      %v111 = vadd.f32 0.0, %v110
      %v112 = vpop.f32.mrf.mxu0
      %113 = vmatprep.mubr.f32.mxu0 0.0
      %v114 = vand.u32 %v33, 4294901760
      %v115 = vsub.f32 %v33, %v114
      %v116 = vand.u32 %v115, 4294901760
      %v117 = vsub.f32 %v115, %v116
      %v118 = vand.u32 %v117, 4294901760
      %119 = vmatmul.mubr.f32.gmra.mxu0 %v118
      %v120 = vpop.f32.mrf.mxu0
      %v121 = vadd.f32 0.0, %v120
      %v122 = vpop.f32.mrf.mxu0
      %123 = vdwg.mxu0
      %124 = vmatprep.subr.mxu0 0.0
      %125 = vmatpush1.msra.mxu0 0.0
      %126 = vmatprep.subr.mxu0 0.0
      %127 = vmatpush1.msra.mxu0 0.0
      %128 = vmatprep.subr.mxu0 0.0
      %129 = vmatpush1.msra.mxu0 0.0
      %130 = vmatprep.subr.mxu0 0.0
      %131 = vmatpush1.msra.mxu0 0.0
      %132 = vmatprep.subr.mxu0 0.0
      %133 = vmatpush1.msra.mxu0 0.0
      %134 = vmatprep.subr.mxu0 0.0
      %135 = vmatpush1.msra.mxu0 0.0
      %136 = vmatprep.subr.mxu0 0.0
      %137 = vmatpush1.msra.mxu0 0.0
      %138 = vmatprep.subr.mxu0 0.0
      %139 = vmatpush1.msra.mxu0 0.0
      %140 = vmatprep.subr.mxu0 0.0
      %141 = vmatpush1.msra.mxu0 0.0
      %142 = vmatprep.subr.mxu0 0.0
      %143 = vmatpush1.msra.mxu0 0.0
      %144 = vmatprep.subr.mxu0 0.0
      %145 = vmatpush1.msra.mxu0 0.0
      %146 = vmatprep.subr.mxu0 0.0
      %147 = vmatpush1.msra.mxu0 0.0
      %148 = vmatprep.subr.mxu0 0.0
      %v149 = vand.u32 %v27, 4294901760
      %v150 = vsub.f32 %v27, %v149
      %v151 = vand.u32 %v150, 4294901760
      %v152 = vsub.f32 %v150, %v151
      %v153 = vand.u32 %v152, 4294901760
      %154 = vmatpush1.msra.mxu0 %v153
      %155 = vmatprep.subr.mxu0 0.0
      %v156 = vand.u32 %v26, 4294901760
      %v157 = vsub.f32 %v26, %v156
      %v158 = vand.u32 %v157, 4294901760
      %v159 = vsub.f32 %v157, %v158
      %v160 = vand.u32 %v159, 4294901760
      %161 = vmatpush1.msra.mxu0 %v160
      %162 = vmatprep.subr.mxu0 0.0
      %v163 = vand.u32 %v25, 4294901760
      %v164 = vsub.f32 %v25, %v163
      %v165 = vand.u32 %v164, 4294901760
      %v166 = vsub.f32 %v164, %v165
      %v167 = vand.u32 %v166, 4294901760
      %168 = vmatpush1.msra.mxu0 %v167
      %169 = vmatprep.subr.mxu0 0.0
      %v170 = vand.u32 %v24, 4294901760
      %v171 = vsub.f32 %v24, %v170
      %v172 = vand.u32 %v171, 4294901760
      %v173 = vsub.f32 %v171, %v172
      %v174 = vand.u32 %v173, 4294901760
      %175 = vmatpush1.msra.mxu0 %v174
      %176 = vmatprep.subr.mxu0 0.0
      %177 = vmatpush2.msra.mxu0 0.0
      %178 = vmatprep.subr.mxu0 0.0
      %179 = vmatpush2.msra.mxu0 0.0
      %180 = vmatprep.subr.mxu0 0.0
      %181 = vmatpush2.msra.mxu0 0.0
      %182 = vmatprep.subr.mxu0 0.0
      %183 = vmatpush2.msra.mxu0 0.0
      %184 = vmatprep.subr.mxu0 0.0
      %185 = vmatpush2.msra.mxu0 0.0
      %186 = vmatprep.subr.mxu0 0.0
      %187 = vmatpush2.msra.mxu0 0.0
      %188 = vmatprep.subr.mxu0 0.0
      %189 = vmatpush2.msra.mxu0 0.0
      %190 = vmatprep.subr.mxu0 0.0
      %191 = vmatpush2.msra.mxu0 0.0
      %192 = vmatprep.subr.mxu0 0.0
      %193 = vmatpush2.msra.mxu0 0.0
      %194 = vmatprep.subr.mxu0 0.0
      %195 = vmatpush2.msra.mxu0 0.0
      %196 = vmatprep.subr.mxu0 0.0
      %197 = vmatpush2.msra.mxu0 0.0
      %198 = vmatprep.subr.mxu0 0.0
      %199 = vmatpush2.msra.mxu0 0.0
      %200 = vmatprep.subr.mxu0 0.0
      %201 = vmatpush2.msra.mxu0 0.0
      %202 = vmatprep.subr.mxu0 0.0
      %203 = vmatpush2.msra.mxu0 0.0
      %204 = vmatprep.subr.mxu0 0.0
      %205 = vmatpush2.msra.mxu0 0.0
      %206 = vmatprep.subr.mxu0 0.0
      %207 = vmatpush2.msra.mxu0 0.0
      %208 = vmatprep.mubr.f32.mxu0 0.0
      %v209 = vand.u32 %v30, 4294901760
      %210 = vmatmul.mubr.f32.gmra.mxu0 %v209
      %v211 = vpop.f32.mrf.mxu0
      %v212 = vadd.f32 %v111, %v211
      %v213 = vpop.f32.mrf.mxu0
      %214 = vmatprep.mubr.f32.mxu0 0.0
      %v215 = vand.u32 %v33, 4294901760
      %216 = vmatmul.mubr.f32.gmra.mxu0 %v215
      %v217 = vpop.f32.mrf.mxu0
      %v218 = vadd.f32 %v121, %v217
      %v219 = vpop.f32.mrf.mxu0
      %220 = vdwg.mxu0
      %221 = vmatprep.subr.mxu0 0.0
      %222 = vmatpush1.msra.mxu0 0.0
      %223 = vmatprep.subr.mxu0 0.0
      %224 = vmatpush1.msra.mxu0 0.0
      %225 = vmatprep.subr.mxu0 0.0
      %226 = vmatpush1.msra.mxu0 0.0
      %227 = vmatprep.subr.mxu0 0.0
      %228 = vmatpush1.msra.mxu0 0.0
      %229 = vmatprep.subr.mxu0 0.0
      %230 = vmatpush1.msra.mxu0 0.0
      %231 = vmatprep.subr.mxu0 0.0
      %232 = vmatpush1.msra.mxu0 0.0
      %233 = vmatprep.subr.mxu0 0.0
      %234 = vmatpush1.msra.mxu0 0.0
      %235 = vmatprep.subr.mxu0 0.0
      %236 = vmatpush1.msra.mxu0 0.0
      %237 = vmatprep.subr.mxu0 0.0
      %238 = vmatpush1.msra.mxu0 0.0
      %239 = vmatprep.subr.mxu0 0.0
      %240 = vmatpush1.msra.mxu0 0.0
      %241 = vmatprep.subr.mxu0 0.0
      %242 = vmatpush1.msra.mxu0 0.0
      %243 = vmatprep.subr.mxu0 0.0
      %244 = vmatpush1.msra.mxu0 0.0
      %245 = vmatprep.subr.mxu0 0.0
      %v246 = vand.u32 %v27, 4294901760
      %v247 = vsub.f32 %v27, %v246
      %248 = vmatpush1.msra.mxu0 %v247
      %249 = vmatprep.subr.mxu0 0.0
      %v250 = vand.u32 %v26, 4294901760
      %v251 = vsub.f32 %v26, %v250
      %252 = vmatpush1.msra.mxu0 %v251
      %253 = vmatprep.subr.mxu0 0.0
      %v254 = vand.u32 %v25, 4294901760
      %v255 = vsub.f32 %v25, %v254
      %256 = vmatpush1.msra.mxu0 %v255
      %257 = vmatprep.subr.mxu0 0.0
      %v258 = vand.u32 %v24, 4294901760
      %v259 = vsub.f32 %v24, %v258
      %260 = vmatpush1.msra.mxu0 %v259
      %261 = vmatprep.subr.mxu0 0.0
      %262 = vmatpush2.msra.mxu0 0.0
      %263 = vmatprep.subr.mxu0 0.0
      %264 = vmatpush2.msra.mxu0 0.0
      %265 = vmatprep.subr.mxu0 0.0
      %266 = vmatpush2.msra.mxu0 0.0
      %267 = vmatprep.subr.mxu0 0.0
      %268 = vmatpush2.msra.mxu0 0.0
      %269 = vmatprep.subr.mxu0 0.0
      %270 = vmatpush2.msra.mxu0 0.0
      %271 = vmatprep.subr.mxu0 0.0
      %272 = vmatpush2.msra.mxu0 0.0
      %273 = vmatprep.subr.mxu0 0.0
      %274 = vmatpush2.msra.mxu0 0.0
      %275 = vmatprep.subr.mxu0 0.0
      %276 = vmatpush2.msra.mxu0 0.0
      %277 = vmatprep.subr.mxu0 0.0
      %278 = vmatpush2.msra.mxu0 0.0
      %279 = vmatprep.subr.mxu0 0.0
      %280 = vmatpush2.msra.mxu0 0.0
      %281 = vmatprep.subr.mxu0 0.0
      %282 = vmatpush2.msra.mxu0 0.0
      %283 = vmatprep.subr.mxu0 0.0
      %284 = vmatpush2.msra.mxu0 0.0
      %285 = vmatprep.subr.mxu0 0.0
      %286 = vmatpush2.msra.mxu0 0.0
      %287 = vmatprep.subr.mxu0 0.0
      %288 = vmatpush2.msra.mxu0 0.0
      %289 = vmatprep.subr.mxu0 0.0
      %290 = vmatpush2.msra.mxu0 0.0
      %291 = vmatprep.subr.mxu0 0.0
      %292 = vmatpush2.msra.mxu0 0.0
      %293 = vmatprep.mubr.f32.mxu0 0.0
      %v294 = vand.u32 %v30, 4294901760
      %v295 = vsub.f32 %v30, %v294
      %296 = vmatmul.mubr.f32.gmra.mxu0 %v295
      %v297 = vpop.f32.mrf.mxu0
      %v298 = vadd.f32 %v212, %v297
      %v299 = vpop.f32.mrf.mxu0
      %300 = vmatprep.mubr.f32.mxu0 0.0
      %v301 = vand.u32 %v33, 4294901760
      %v302 = vsub.f32 %v33, %v301
      %303 = vmatmul.mubr.f32.gmra.mxu0 %v302
      %v304 = vpop.f32.mrf.mxu0
      %v305 = vadd.f32 %v218, %v304
      %v306 = vpop.f32.mrf.mxu0
      %307 = vdwg.mxu0
      %308 = vmatprep.subr.mxu0 0.0
      %309 = vmatpush1.msra.mxu0 0.0
      %310 = vmatprep.subr.mxu0 0.0
      %311 = vmatpush1.msra.mxu0 0.0
      %312 = vmatprep.subr.mxu0 0.0
      %313 = vmatpush1.msra.mxu0 0.0
      %314 = vmatprep.subr.mxu0 0.0
      %315 = vmatpush1.msra.mxu0 0.0
      %316 = vmatprep.subr.mxu0 0.0
      %317 = vmatpush1.msra.mxu0 0.0
      %318 = vmatprep.subr.mxu0 0.0
      %319 = vmatpush1.msra.mxu0 0.0
      %320 = vmatprep.subr.mxu0 0.0
      %321 = vmatpush1.msra.mxu0 0.0
      %322 = vmatprep.subr.mxu0 0.0
      %323 = vmatpush1.msra.mxu0 0.0
      %324 = vmatprep.subr.mxu0 0.0
      %325 = vmatpush1.msra.mxu0 0.0
      %326 = vmatprep.subr.mxu0 0.0
      %327 = vmatpush1.msra.mxu0 0.0
      %328 = vmatprep.subr.mxu0 0.0
      %329 = vmatpush1.msra.mxu0 0.0
      %330 = vmatprep.subr.mxu0 0.0
      %331 = vmatpush1.msra.mxu0 0.0
      %332 = vmatprep.subr.mxu0 0.0
      %v333 = vand.u32 %v27, 4294901760
      %334 = vmatpush1.msra.mxu0 %v333
      %335 = vmatprep.subr.mxu0 0.0
      %v336 = vand.u32 %v26, 4294901760
      %337 = vmatpush1.msra.mxu0 %v336
      %338 = vmatprep.subr.mxu0 0.0
      %v339 = vand.u32 %v25, 4294901760
      %340 = vmatpush1.msra.mxu0 %v339
      %341 = vmatprep.subr.mxu0 0.0
      %v342 = vand.u32 %v24, 4294901760
      %343 = vmatpush1.msra.mxu0 %v342
      %344 = vmatprep.subr.mxu0 0.0
      %345 = vmatpush2.msra.mxu0 0.0
      %346 = vmatprep.subr.mxu0 0.0
      %347 = vmatpush2.msra.mxu0 0.0
      %348 = vmatprep.subr.mxu0 0.0
      %349 = vmatpush2.msra.mxu0 0.0
      %350 = vmatprep.subr.mxu0 0.0
      %351 = vmatpush2.msra.mxu0 0.0
      %352 = vmatprep.subr.mxu0 0.0
      %353 = vmatpush2.msra.mxu0 0.0
      %354 = vmatprep.subr.mxu0 0.0
      %355 = vmatpush2.msra.mxu0 0.0
      %356 = vmatprep.subr.mxu0 0.0
      %357 = vmatpush2.msra.mxu0 0.0
      %358 = vmatprep.subr.mxu0 0.0
      %359 = vmatpush2.msra.mxu0 0.0
      %360 = vmatprep.subr.mxu0 0.0
      %361 = vmatpush2.msra.mxu0 0.0
      %362 = vmatprep.subr.mxu0 0.0
      %363 = vmatpush2.msra.mxu0 0.0
      %364 = vmatprep.subr.mxu0 0.0
      %365 = vmatpush2.msra.mxu0 0.0
      %366 = vmatprep.subr.mxu0 0.0
      %367 = vmatpush2.msra.mxu0 0.0
      %368 = vmatprep.subr.mxu0 0.0
      %369 = vmatpush2.msra.mxu0 0.0
      %370 = vmatprep.subr.mxu0 0.0
      %371 = vmatpush2.msra.mxu0 0.0
      %372 = vmatprep.subr.mxu0 0.0
      %373 = vmatpush2.msra.mxu0 0.0
      %374 = vmatprep.subr.mxu0 0.0
      %375 = vmatpush2.msra.mxu0 0.0
      %376 = vmatprep.mubr.f32.mxu0 0.0
      %v377 = vand.u32 %v30, 4294901760
      %v378 = vsub.f32 %v30, %v377
      %v379 = vand.u32 %v378, 4294901760
      %380 = vmatmul.mubr.f32.gmra.mxu0 %v379
      %v381 = vpop.f32.mrf.mxu0
      %v382 = vadd.f32 %v298, %v381
      %v383 = vpop.f32.mrf.mxu0
      %384 = vmatprep.mubr.f32.mxu0 0.0
      %v385 = vand.u32 %v33, 4294901760
      %v386 = vsub.f32 %v33, %v385
      %v387 = vand.u32 %v386, 4294901760
      %388 = vmatmul.mubr.f32.gmra.mxu0 %v387
      %v389 = vpop.f32.mrf.mxu0
      %v390 = vadd.f32 %v305, %v389
      %v391 = vpop.f32.mrf.mxu0
      %392 = vdwg.mxu0
      %393 = vmatprep.subr.mxu0 0.0
      %394 = vmatpush1.msra.mxu0 0.0
      %395 = vmatprep.subr.mxu0 0.0
      %396 = vmatpush1.msra.mxu0 0.0
      %397 = vmatprep.subr.mxu0 0.0
      %398 = vmatpush1.msra.mxu0 0.0
      %399 = vmatprep.subr.mxu0 0.0
      %400 = vmatpush1.msra.mxu0 0.0
      %401 = vmatprep.subr.mxu0 0.0
      %402 = vmatpush1.msra.mxu0 0.0
      %403 = vmatprep.subr.mxu0 0.0
      %404 = vmatpush1.msra.mxu0 0.0
      %405 = vmatprep.subr.mxu0 0.0
      %406 = vmatpush1.msra.mxu0 0.0
      %407 = vmatprep.subr.mxu0 0.0
      %408 = vmatpush1.msra.mxu0 0.0
      %409 = vmatprep.subr.mxu0 0.0
      %410 = vmatpush1.msra.mxu0 0.0
      %411 = vmatprep.subr.mxu0 0.0
      %412 = vmatpush1.msra.mxu0 0.0
      %413 = vmatprep.subr.mxu0 0.0
      %414 = vmatpush1.msra.mxu0 0.0
      %415 = vmatprep.subr.mxu0 0.0
      %416 = vmatpush1.msra.mxu0 0.0
      %417 = vmatprep.subr.mxu0 0.0
      %v418 = vand.u32 %v27, 4294901760
      %v419 = vsub.f32 %v27, %v418
      %v420 = vand.u32 %v419, 4294901760
      %421 = vmatpush1.msra.mxu0 %v420
      %422 = vmatprep.subr.mxu0 0.0
      %v423 = vand.u32 %v26, 4294901760
      %v424 = vsub.f32 %v26, %v423
      %v425 = vand.u32 %v424, 4294901760
      %426 = vmatpush1.msra.mxu0 %v425
      %427 = vmatprep.subr.mxu0 0.0
      %v428 = vand.u32 %v25, 4294901760
      %v429 = vsub.f32 %v25, %v428
      %v430 = vand.u32 %v429, 4294901760
      %431 = vmatpush1.msra.mxu0 %v430
      %432 = vmatprep.subr.mxu0 0.0
      %v433 = vand.u32 %v24, 4294901760
      %v434 = vsub.f32 %v24, %v433
      %v435 = vand.u32 %v434, 4294901760
      %436 = vmatpush1.msra.mxu0 %v435
      %437 = vmatprep.subr.mxu0 0.0
      %438 = vmatpush2.msra.mxu0 0.0
      %439 = vmatprep.subr.mxu0 0.0
      %440 = vmatpush2.msra.mxu0 0.0
      %441 = vmatprep.subr.mxu0 0.0
      %442 = vmatpush2.msra.mxu0 0.0
      %443 = vmatprep.subr.mxu0 0.0
      %444 = vmatpush2.msra.mxu0 0.0
      %445 = vmatprep.subr.mxu0 0.0
      %446 = vmatpush2.msra.mxu0 0.0
      %447 = vmatprep.subr.mxu0 0.0
      %448 = vmatpush2.msra.mxu0 0.0
      %449 = vmatprep.subr.mxu0 0.0
      %450 = vmatpush2.msra.mxu0 0.0
      %451 = vmatprep.subr.mxu0 0.0
      %452 = vmatpush2.msra.mxu0 0.0
      %453 = vmatprep.subr.mxu0 0.0
      %454 = vmatpush2.msra.mxu0 0.0
      %455 = vmatprep.subr.mxu0 0.0
      %456 = vmatpush2.msra.mxu0 0.0
      %457 = vmatprep.subr.mxu0 0.0
      %458 = vmatpush2.msra.mxu0 0.0
      %459 = vmatprep.subr.mxu0 0.0
      %460 = vmatpush2.msra.mxu0 0.0
      %461 = vmatprep.subr.mxu0 0.0
      %462 = vmatpush2.msra.mxu0 0.0
      %463 = vmatprep.subr.mxu0 0.0
      %464 = vmatpush2.msra.mxu0 0.0
      %465 = vmatprep.subr.mxu0 0.0
      %466 = vmatpush2.msra.mxu0 0.0
      %467 = vmatprep.subr.mxu0 0.0
      %468 = vmatpush2.msra.mxu0 0.0
      %469 = vmatprep.mubr.f32.mxu0 0.0
      %v470 = vand.u32 %v30, 4294901760
      %471 = vmatmul.mubr.f32.gmra.mxu0 %v470
      %v472 = vpop.f32.mrf.mxu0
      %v473 = vadd.f32 %v382, %v472
      %v474 = vpop.f32.mrf.mxu0
      %475 = vmatprep.mubr.f32.mxu0 0.0
      %v476 = vand.u32 %v33, 4294901760
      %477 = vmatmul.mubr.f32.gmra.mxu0 %v476
      %v478 = vpop.f32.mrf.mxu0
      %v479 = vadd.f32 %v390, %v478
      %v480 = vpop.f32.mrf.mxu0
      %481 = vdwg.mxu0
      %482 = vmatprep.subr.mxu0 0.0
      %483 = vmatpush1.msra.mxu0 0.0
      %484 = vmatprep.subr.mxu0 0.0
      %485 = vmatpush1.msra.mxu0 0.0
      %486 = vmatprep.subr.mxu0 0.0
      %487 = vmatpush1.msra.mxu0 0.0
      %488 = vmatprep.subr.mxu0 0.0
      %489 = vmatpush1.msra.mxu0 0.0
      %490 = vmatprep.subr.mxu0 0.0
      %491 = vmatpush1.msra.mxu0 0.0
      %492 = vmatprep.subr.mxu0 0.0
      %493 = vmatpush1.msra.mxu0 0.0
      %494 = vmatprep.subr.mxu0 0.0
      %495 = vmatpush1.msra.mxu0 0.0
      %496 = vmatprep.subr.mxu0 0.0
      %497 = vmatpush1.msra.mxu0 0.0
      %498 = vmatprep.subr.mxu0 0.0
      %499 = vmatpush1.msra.mxu0 0.0
      %500 = vmatprep.subr.mxu0 0.0
      %501 = vmatpush1.msra.mxu0 0.0
      %502 = vmatprep.subr.mxu0 0.0
      %503 = vmatpush1.msra.mxu0 0.0
      %504 = vmatprep.subr.mxu0 0.0
      %505 = vmatpush1.msra.mxu0 0.0
      %506 = vmatprep.subr.mxu0 0.0
      %v507 = vand.u32 %v27, 4294901760
      %508 = vmatpush1.msra.mxu0 %v507
      %509 = vmatprep.subr.mxu0 0.0
      %v510 = vand.u32 %v26, 4294901760
      %511 = vmatpush1.msra.mxu0 %v510
      %512 = vmatprep.subr.mxu0 0.0
      %v513 = vand.u32 %v25, 4294901760
      %514 = vmatpush1.msra.mxu0 %v513
      %515 = vmatprep.subr.mxu0 0.0
      %v516 = vand.u32 %v24, 4294901760
      %517 = vmatpush1.msra.mxu0 %v516
      %518 = vmatprep.subr.mxu0 0.0
      %519 = vmatpush2.msra.mxu0 0.0
      %520 = vmatprep.subr.mxu0 0.0
      %521 = vmatpush2.msra.mxu0 0.0
      %522 = vmatprep.subr.mxu0 0.0
      %523 = vmatpush2.msra.mxu0 0.0
      %524 = vmatprep.subr.mxu0 0.0
      %525 = vmatpush2.msra.mxu0 0.0
      %526 = vmatprep.subr.mxu0 0.0
      %527 = vmatpush2.msra.mxu0 0.0
      %528 = vmatprep.subr.mxu0 0.0
      %529 = vmatpush2.msra.mxu0 0.0
      %530 = vmatprep.subr.mxu0 0.0
      %531 = vmatpush2.msra.mxu0 0.0
      %532 = vmatprep.subr.mxu0 0.0
      %533 = vmatpush2.msra.mxu0 0.0
      %534 = vmatprep.subr.mxu0 0.0
      %535 = vmatpush2.msra.mxu0 0.0
      %536 = vmatprep.subr.mxu0 0.0
      %537 = vmatpush2.msra.mxu0 0.0
      %538 = vmatprep.subr.mxu0 0.0
      %539 = vmatpush2.msra.mxu0 0.0
      %540 = vmatprep.subr.mxu0 0.0
      %541 = vmatpush2.msra.mxu0 0.0
      %542 = vmatprep.subr.mxu0 0.0
      %543 = vmatpush2.msra.mxu0 0.0
      %544 = vmatprep.subr.mxu0 0.0
      %545 = vmatpush2.msra.mxu0 0.0
      %546 = vmatprep.subr.mxu0 0.0
      %547 = vmatpush2.msra.mxu0 0.0
      %548 = vmatprep.subr.mxu0 0.0
      %549 = vmatpush2.msra.mxu0 0.0
      %550 = vmatprep.mubr.f32.mxu0 0.0
      %v551 = vand.u32 %v30, 4294901760
      %552 = vmatmul.mubr.f32.gmra.mxu0 %v551
      %v553 = vpop.f32.mrf.mxu0
      %v554 = vadd.f32 %v473, %v553
      %v555 = vpop.f32.mrf.mxu0
      %556 = vmatprep.mubr.f32.mxu0 0.0
      %v557 = vand.u32 %v33, 4294901760
      %558 = vmatmul.mubr.f32.gmra.mxu0 %v557
      %v559 = vpop.f32.mrf.mxu0
      %v560 = vadd.f32 %v479, %v559
      %v561 = vpop.f32.mrf.mxu0
      %562 = vdwg.mxu0
      %563 = vst [vmem:[#allocation2] sm:$0xff] %v554
      %564 = vst [vmem:[#allocation2 + $0x8] sm:$0xff] %v560
    $region21: #{tpu_custom_call.1} parent=1 // pred_fallthru
      _
    %v565 = vld [vmem:[#allocation2] sm:$0xff]
    %v566 = vld [vmem:[#allocation2 + $0x8] sm:$0xff]
    %v567 = vld [vmem:[%s2] sm:$0xff]
    %v568 = vld [vmem:[%s2 + $0x8] sm:$0xff]
    %v569 = vld [vmem:[%s2 + $0x10] sm:$0xff]
    %v570 = vld [vmem:[%s2 + $0x18] sm:$0xff]
    %v571 = vld [vmem:[%s2 + $0x20] sm:$0xff]
    %v572 = vld [vmem:[%s2 + $0x28] sm:$0xff]
    %v573 = vld [vmem:[%s2 + $0x30] sm:$0xff]
    %v574 = vld [vmem:[%s2 + $0x38] sm:$0xff]
    %v575 = vld [vmem:[%s2 + $0x40] sm:$0xff]
    %v576 = vld [vmem:[%s2 + $0x48] sm:$0xff]
    %v577 = vld [vmem:[%s2 + $0x50] sm:$0xff]
    %v578 = vld [vmem:[%s2 + $0x58] sm:$0xff]
    %v579 = vld [vmem:[%s2 + $0x60] sm:$0xff]
    %v580 = vld [vmem:[%s2 + $0x68] sm:$0xff]
    %v581 = vld [vmem:[%s2 + $0x70] sm:$0xff]
    %v582 = vld [vmem:[%s2 + $0x78] sm:$0xff]
    %v583 = vld [vmem:[%s3] sm:$0x1]
    %v585 = vlaneseq
    %v586 = vshrl.u32 %v585, 7
    %v587 = vsub.s32 0, %v586
    %v588 = vrot.slane %v583, %v587
    %590 = vmatprep.subr.mxu0 0.0
    %v591 = vand.u32 %v582, 4294901760
    %592 = vmatpush1.msra.mxu0 %v591
    %593 = vmatprep.subr.mxu0 0.0
    %v594 = vand.u32 %v581, 4294901760
    %595 = vmatpush1.msra.mxu0 %v594
    %596 = vmatprep.subr.mxu0 0.0
    %v597 = vand.u32 %v580, 4294901760
    %598 = vmatpush1.msra.mxu0 %v597
    %599 = vmatprep.subr.mxu0 0.0
    %v600 = vand.u32 %v579, 4294901760
    %601 = vmatpush1.msra.mxu0 %v600
    %602 = vmatprep.subr.mxu0 0.0
    %v603 = vand.u32 %v578, 4294901760
    %604 = vmatpush1.msra.mxu0 %v603
    %605 = vmatprep.subr.mxu0 0.0
    %v606 = vand.u32 %v577, 4294901760
    %607 = vmatpush1.msra.mxu0 %v606
    %608 = vmatprep.subr.mxu0 0.0
    %v609 = vand.u32 %v576, 4294901760
    %610 = vmatpush1.msra.mxu0 %v609
    %611 = vmatprep.subr.mxu0 0.0
    %v612 = vand.u32 %v575, 4294901760
    %613 = vmatpush1.msra.mxu0 %v612
    %614 = vmatprep.subr.mxu0 0.0
    %v615 = vand.u32 %v574, 4294901760
    %616 = vmatpush1.msra.mxu0 %v615
    %617 = vmatprep.subr.mxu0 0.0
    %v618 = vand.u32 %v573, 4294901760
    %619 = vmatpush1.msra.mxu0 %v618
    %620 = vmatprep.subr.mxu0 0.0
    %v621 = vand.u32 %v572, 4294901760
    %622 = vmatpush1.msra.mxu0 %v621
    %623 = vmatprep.subr.mxu0 0.0
    %v624 = vand.u32 %v571, 4294901760
    %625 = vmatpush1.msra.mxu0 %v624
    %626 = vmatprep.subr.mxu0 0.0
    %v627 = vand.u32 %v570, 4294901760
    %628 = vmatpush1.msra.mxu0 %v627
    %629 = vmatprep.subr.mxu0 0.0
    %v630 = vand.u32 %v569, 4294901760
    %631 = vmatpush1.msra.mxu0 %v630
    %632 = vmatprep.subr.mxu0 0.0
    %v633 = vand.u32 %v568, 4294901760
    %634 = vmatpush1.msra.mxu0 %v633
    %635 = vmatprep.subr.mxu0 0.0
    %v636 = vand.u32 %v567, 4294901760
    %637 = vmatpush1.msra.mxu0 %v636
    %638 = vmatprep.subr.mxu0 0.0
    %639 = vmatpush2.msra.mxu0 0.0
    %640 = vmatprep.subr.mxu0 0.0
    %641 = vmatpush2.msra.mxu0 0.0
    %642 = vmatprep.subr.mxu0 0.0
    %643 = vmatpush2.msra.mxu0 0.0
    %644 = vmatprep.subr.mxu0 0.0
    %645 = vmatpush2.msra.mxu0 0.0
    %646 = vmatprep.subr.mxu0 0.0
    %647 = vmatpush2.msra.mxu0 0.0
    %648 = vmatprep.subr.mxu0 0.0
    %649 = vmatpush2.msra.mxu0 0.0
    %650 = vmatprep.subr.mxu0 0.0
    %651 = vmatpush2.msra.mxu0 0.0
    %652 = vmatprep.subr.mxu0 0.0
    %653 = vmatpush2.msra.mxu0 0.0
    %654 = vmatprep.subr.mxu0 0.0
    %655 = vmatpush2.msra.mxu0 0.0
    %656 = vmatprep.subr.mxu0 0.0
    %657 = vmatpush2.msra.mxu0 0.0
    %658 = vmatprep.subr.mxu0 0.0
    %659 = vmatpush2.msra.mxu0 0.0
    %660 = vmatprep.subr.mxu0 0.0
    %661 = vmatpush2.msra.mxu0 0.0
    %662 = vmatprep.subr.mxu0 0.0
    %663 = vmatpush2.msra.mxu0 0.0
    %664 = vmatprep.subr.mxu0 0.0
    %665 = vmatpush2.msra.mxu0 0.0
    %666 = vmatprep.subr.mxu0 0.0
    %667 = vmatpush2.msra.mxu0 0.0
    %668 = vmatprep.subr.mxu0 0.0
    %669 = vmatpush2.msra.mxu0 0.0
    %670 = vmatprep.mubr.f32.mxu0 0.0
    %v671 = vand.u32 %v565, 4294901760
    %v672 = vsub.f32 %v565, %v671
    %v673 = vand.u32 %v672, 4294901760
    %v674 = vsub.f32 %v672, %v673
    %v675 = vand.u32 %v674, 4294901760
    %676 = vmatmul.mubr.f32.gmra.mxu0 %v675
    %v677 = vpop.f32.mrf.mxu0
    %v678 = vadd.f32 %v588, %v677
    %v679 = vpop.f32.mrf.mxu0
    %680 = vmatprep.mubr.f32.mxu0 0.0
    %v681 = vand.u32 %v566, 4294901760
    %v682 = vsub.f32 %v566, %v681
    %v683 = vand.u32 %v682, 4294901760
    %v684 = vsub.f32 %v682, %v683
    %v685 = vand.u32 %v684, 4294901760
    %686 = vmatmul.mubr.f32.gmra.mxu0 %v685
    %v687 = vpop.f32.mrf.mxu0
    %v688 = vadd.f32 %v588, %v687
    %v689 = vpop.f32.mrf.mxu0
    %690 = vdwg.mxu0
    %691 = vmatprep.subr.mxu0 0.0
    %v692 = vand.u32 %v582, 4294901760
    %v693 = vsub.f32 %v582, %v692
    %v694 = vand.u32 %v693, 4294901760
    %v695 = vsub.f32 %v693, %v694
    %v696 = vand.u32 %v695, 4294901760
    %697 = vmatpush1.msra.mxu0 %v696
    %698 = vmatprep.subr.mxu0 0.0
    %v699 = vand.u32 %v581, 4294901760
    %v700 = vsub.f32 %v581, %v699
    %v701 = vand.u32 %v700, 4294901760
    %v702 = vsub.f32 %v700, %v701
    %v703 = vand.u32 %v702, 4294901760
    %704 = vmatpush1.msra.mxu0 %v703
    %705 = vmatprep.subr.mxu0 0.0
    %v706 = vand.u32 %v580, 4294901760
    %v707 = vsub.f32 %v580, %v706
    %v708 = vand.u32 %v707, 4294901760
    %v709 = vsub.f32 %v707, %v708
    %v710 = vand.u32 %v709, 4294901760
    %711 = vmatpush1.msra.mxu0 %v710
    %712 = vmatprep.subr.mxu0 0.0
    %v713 = vand.u32 %v579, 4294901760
    %v714 = vsub.f32 %v579, %v713
    %v715 = vand.u32 %v714, 4294901760
    %v716 = vsub.f32 %v714, %v715
    %v717 = vand.u32 %v716, 4294901760
    %718 = vmatpush1.msra.mxu0 %v717
    %719 = vmatprep.subr.mxu0 0.0
    %v720 = vand.u32 %v578, 4294901760
    %v721 = vsub.f32 %v578, %v720
    %v722 = vand.u32 %v721, 4294901760
    %v723 = vsub.f32 %v721, %v722
    %v724 = vand.u32 %v723, 4294901760
    %725 = vmatpush1.msra.mxu0 %v724
    %726 = vmatprep.subr.mxu0 0.0
    %v727 = vand.u32 %v577, 4294901760
    %v728 = vsub.f32 %v577, %v727
    %v729 = vand.u32 %v728, 4294901760
    %v730 = vsub.f32 %v728, %v729
    %v731 = vand.u32 %v730, 4294901760
    %732 = vmatpush1.msra.mxu0 %v731
    %733 = vmatprep.subr.mxu0 0.0
    %v734 = vand.u32 %v576, 4294901760
    %v735 = vsub.f32 %v576, %v734
    %v736 = vand.u32 %v735, 4294901760
    %v737 = vsub.f32 %v735, %v736
    %v738 = vand.u32 %v737, 4294901760
    %739 = vmatpush1.msra.mxu0 %v738
    %740 = vmatprep.subr.mxu0 0.0
    %v741 = vand.u32 %v575, 4294901760
    %v742 = vsub.f32 %v575, %v741
    %v743 = vand.u32 %v742, 4294901760
    %v744 = vsub.f32 %v742, %v743
    %v745 = vand.u32 %v744, 4294901760
    %746 = vmatpush1.msra.mxu0 %v745
    %747 = vmatprep.subr.mxu0 0.0
    %v748 = vand.u32 %v574, 4294901760
    %v749 = vsub.f32 %v574, %v748
    %v750 = vand.u32 %v749, 4294901760
    %v751 = vsub.f32 %v749, %v750
    %v752 = vand.u32 %v751, 4294901760
    %753 = vmatpush1.msra.mxu0 %v752
    %754 = vmatprep.subr.mxu0 0.0
    %v755 = vand.u32 %v573, 4294901760
    %v756 = vsub.f32 %v573, %v755
    %v757 = vand.u32 %v756, 4294901760
    %v758 = vsub.f32 %v756, %v757
    %v759 = vand.u32 %v758, 4294901760
    %760 = vmatpush1.msra.mxu0 %v759
    %761 = vmatprep.subr.mxu0 0.0
    %v762 = vand.u32 %v572, 4294901760
    %v763 = vsub.f32 %v572, %v762
    %v764 = vand.u32 %v763, 4294901760
    %v765 = vsub.f32 %v763, %v764
    %v766 = vand.u32 %v765, 4294901760
    %767 = vmatpush1.msra.mxu0 %v766
    %768 = vmatprep.subr.mxu0 0.0
    %v769 = vand.u32 %v571, 4294901760
    %v770 = vsub.f32 %v571, %v769
    %v771 = vand.u32 %v770, 4294901760
    %v772 = vsub.f32 %v770, %v771
    %v773 = vand.u32 %v772, 4294901760
    %774 = vmatpush1.msra.mxu0 %v773
    %775 = vmatprep.subr.mxu0 0.0
    %v776 = vand.u32 %v570, 4294901760
    %v777 = vsub.f32 %v570, %v776
    %v778 = vand.u32 %v777, 4294901760
    %v779 = vsub.f32 %v777, %v778
    %v780 = vand.u32 %v779, 4294901760
    %781 = vmatpush1.msra.mxu0 %v780
    %782 = vmatprep.subr.mxu0 0.0
    %v783 = vand.u32 %v569, 4294901760
    %v784 = vsub.f32 %v569, %v783
    %v785 = vand.u32 %v784, 4294901760
    %v786 = vsub.f32 %v784, %v785
    %v787 = vand.u32 %v786, 4294901760
    %788 = vmatpush1.msra.mxu0 %v787
    %789 = vmatprep.subr.mxu0 0.0
    %v790 = vand.u32 %v568, 4294901760
    %v791 = vsub.f32 %v568, %v790
    %v792 = vand.u32 %v791, 4294901760
    %v793 = vsub.f32 %v791, %v792
    %v794 = vand.u32 %v793, 4294901760
    %795 = vmatpush1.msra.mxu0 %v794
    %796 = vmatprep.subr.mxu0 0.0
    %v797 = vand.u32 %v567, 4294901760
    %v798 = vsub.f32 %v567, %v797
    %v799 = vand.u32 %v798, 4294901760
    %v800 = vsub.f32 %v798, %v799
    %v801 = vand.u32 %v800, 4294901760
    %802 = vmatpush1.msra.mxu0 %v801
    %803 = vmatprep.subr.mxu0 0.0
    %804 = vmatpush2.msra.mxu0 0.0
    %805 = vmatprep.subr.mxu0 0.0
    %806 = vmatpush2.msra.mxu0 0.0
    %807 = vmatprep.subr.mxu0 0.0
    %808 = vmatpush2.msra.mxu0 0.0
    %809 = vmatprep.subr.mxu0 0.0
    %810 = vmatpush2.msra.mxu0 0.0
    %811 = vmatprep.subr.mxu0 0.0
    %812 = vmatpush2.msra.mxu0 0.0
    %813 = vmatprep.subr.mxu0 0.0
    %814 = vmatpush2.msra.mxu0 0.0
    %815 = vmatprep.subr.mxu0 0.0
    %816 = vmatpush2.msra.mxu0 0.0
    %817 = vmatprep.subr.mxu0 0.0
    %818 = vmatpush2.msra.mxu0 0.0
    %819 = vmatprep.subr.mxu0 0.0
    %820 = vmatpush2.msra.mxu0 0.0
    %821 = vmatprep.subr.mxu0 0.0
    %822 = vmatpush2.msra.mxu0 0.0
    %823 = vmatprep.subr.mxu0 0.0
    %824 = vmatpush2.msra.mxu0 0.0
    %825 = vmatprep.subr.mxu0 0.0
    %826 = vmatpush2.msra.mxu0 0.0
    %827 = vmatprep.subr.mxu0 0.0
    %828 = vmatpush2.msra.mxu0 0.0
    %829 = vmatprep.subr.mxu0 0.0
    %830 = vmatpush2.msra.mxu0 0.0
    %831 = vmatprep.subr.mxu0 0.0
    %832 = vmatpush2.msra.mxu0 0.0
    %833 = vmatprep.subr.mxu0 0.0
    %834 = vmatpush2.msra.mxu0 0.0
    %835 = vmatprep.mubr.f32.mxu0 0.0
    %v836 = vand.u32 %v565, 4294901760
    %837 = vmatmul.mubr.f32.gmra.mxu0 %v836
    %v838 = vpop.f32.mrf.mxu0
    %v839 = vadd.f32 %v678, %v838
    %v840 = vpop.f32.mrf.mxu0
    %841 = vmatprep.mubr.f32.mxu0 0.0
    %v842 = vand.u32 %v566, 4294901760
    %843 = vmatmul.mubr.f32.gmra.mxu0 %v842
    %v844 = vpop.f32.mrf.mxu0
    %v845 = vadd.f32 %v688, %v844
    %v846 = vpop.f32.mrf.mxu0
    %847 = vdwg.mxu0
    %848 = vmatprep.subr.mxu0 0.0
    %v849 = vand.u32 %v582, 4294901760
    %v850 = vsub.f32 %v582, %v849
    %851 = vmatpush1.msra.mxu0 %v850
    %852 = vmatprep.subr.mxu0 0.0
    %v853 = vand.u32 %v581, 4294901760
    %v854 = vsub.f32 %v581, %v853
    %855 = vmatpush1.msra.mxu0 %v854
    %856 = vmatprep.subr.mxu0 0.0
    %v857 = vand.u32 %v580, 4294901760
    %v858 = vsub.f32 %v580, %v857
    %859 = vmatpush1.msra.mxu0 %v858
    %860 = vmatprep.subr.mxu0 0.0
    %v861 = vand.u32 %v579, 4294901760
    %v862 = vsub.f32 %v579, %v861
    %863 = vmatpush1.msra.mxu0 %v862
    %864 = vmatprep.subr.mxu0 0.0
    %v865 = vand.u32 %v578, 4294901760
    %v866 = vsub.f32 %v578, %v865
    %867 = vmatpush1.msra.mxu0 %v866
    %868 = vmatprep.subr.mxu0 0.0
    %v869 = vand.u32 %v577, 4294901760
    %v870 = vsub.f32 %v577, %v869
    %871 = vmatpush1.msra.mxu0 %v870
    %872 = vmatprep.subr.mxu0 0.0
    %v873 = vand.u32 %v576, 4294901760
    %v874 = vsub.f32 %v576, %v873
    %875 = vmatpush1.msra.mxu0 %v874
    %876 = vmatprep.subr.mxu0 0.0
    %v877 = vand.u32 %v575, 4294901760
    %v878 = vsub.f32 %v575, %v877
    %879 = vmatpush1.msra.mxu0 %v878
    %880 = vmatprep.subr.mxu0 0.0
    %v881 = vand.u32 %v574, 4294901760
    %v882 = vsub.f32 %v574, %v881
    %883 = vmatpush1.msra.mxu0 %v882
    %884 = vmatprep.subr.mxu0 0.0
    %v885 = vand.u32 %v573, 4294901760
    %v886 = vsub.f32 %v573, %v885
    %887 = vmatpush1.msra.mxu0 %v886
    %888 = vmatprep.subr.mxu0 0.0
    %v889 = vand.u32 %v572, 4294901760
    %v890 = vsub.f32 %v572, %v889
    %891 = vmatpush1.msra.mxu0 %v890
    %892 = vmatprep.subr.mxu0 0.0
    %v893 = vand.u32 %v571, 4294901760
    %v894 = vsub.f32 %v571, %v893
    %895 = vmatpush1.msra.mxu0 %v894
    %896 = vmatprep.subr.mxu0 0.0
    %v897 = vand.u32 %v570, 4294901760
    %v898 = vsub.f32 %v570, %v897
    %899 = vmatpush1.msra.mxu0 %v898
    %900 = vmatprep.subr.mxu0 0.0
    %v901 = vand.u32 %v569, 4294901760
    %v902 = vsub.f32 %v569, %v901
    %903 = vmatpush1.msra.mxu0 %v902
    %904 = vmatprep.subr.mxu0 0.0
    %v905 = vand.u32 %v568, 4294901760
    %v906 = vsub.f32 %v568, %v905
    %907 = vmatpush1.msra.mxu0 %v906
    %908 = vmatprep.subr.mxu0 0.0
    %v909 = vand.u32 %v567, 4294901760
    %v910 = vsub.f32 %v567, %v909
    %911 = vmatpush1.msra.mxu0 %v910
    %912 = vmatprep.subr.mxu0 0.0
    %913 = vmatpush2.msra.mxu0 0.0
    %914 = vmatprep.subr.mxu0 0.0
    %915 = vmatpush2.msra.mxu0 0.0
    %916 = vmatprep.subr.mxu0 0.0
    %917 = vmatpush2.msra.mxu0 0.0
    %918 = vmatprep.subr.mxu0 0.0
    %919 = vmatpush2.msra.mxu0 0.0
    %920 = vmatprep.subr.mxu0 0.0
    %921 = vmatpush2.msra.mxu0 0.0
    %922 = vmatprep.subr.mxu0 0.0
    %923 = vmatpush2.msra.mxu0 0.0
    %924 = vmatprep.subr.mxu0 0.0
    %925 = vmatpush2.msra.mxu0 0.0
    %926 = vmatprep.subr.mxu0 0.0
    %927 = vmatpush2.msra.mxu0 0.0
    %928 = vmatprep.subr.mxu0 0.0
    %929 = vmatpush2.msra.mxu0 0.0
    %930 = vmatprep.subr.mxu0 0.0
    %931 = vmatpush2.msra.mxu0 0.0
    %932 = vmatprep.subr.mxu0 0.0
    %933 = vmatpush2.msra.mxu0 0.0
    %934 = vmatprep.subr.mxu0 0.0
    %935 = vmatpush2.msra.mxu0 0.0
    %936 = vmatprep.subr.mxu0 0.0
    %937 = vmatpush2.msra.mxu0 0.0
    %938 = vmatprep.subr.mxu0 0.0
    %939 = vmatpush2.msra.mxu0 0.0
    %940 = vmatprep.subr.mxu0 0.0
    %941 = vmatpush2.msra.mxu0 0.0
    %942 = vmatprep.subr.mxu0 0.0
    %943 = vmatpush2.msra.mxu0 0.0
    %944 = vmatprep.mubr.f32.mxu0 0.0
    %v945 = vand.u32 %v565, 4294901760
    %v946 = vsub.f32 %v565, %v945
    %947 = vmatmul.mubr.f32.gmra.mxu0 %v946
    %v948 = vpop.f32.mrf.mxu0
    %v949 = vadd.f32 %v839, %v948
    %v950 = vpop.f32.mrf.mxu0
    %951 = vmatprep.mubr.f32.mxu0 0.0
    %v952 = vand.u32 %v566, 4294901760
    %v953 = vsub.f32 %v566, %v952
    %954 = vmatmul.mubr.f32.gmra.mxu0 %v953
    %v955 = vpop.f32.mrf.mxu0
    %v956 = vadd.f32 %v845, %v955
    %v957 = vpop.f32.mrf.mxu0
    %958 = vdwg.mxu0
    %959 = vmatprep.subr.mxu0 0.0
    %v960 = vand.u32 %v582, 4294901760
    %961 = vmatpush1.msra.mxu0 %v960
    %962 = vmatprep.subr.mxu0 0.0
    %v963 = vand.u32 %v581, 4294901760
    %964 = vmatpush1.msra.mxu0 %v963
    %965 = vmatprep.subr.mxu0 0.0
    %v966 = vand.u32 %v580, 4294901760
    %967 = vmatpush1.msra.mxu0 %v966
    %968 = vmatprep.subr.mxu0 0.0
    %v969 = vand.u32 %v579, 4294901760
    %970 = vmatpush1.msra.mxu0 %v969
    %971 = vmatprep.subr.mxu0 0.0
    %v972 = vand.u32 %v578, 4294901760
    %973 = vmatpush1.msra.mxu0 %v972
    %974 = vmatprep.subr.mxu0 0.0
    %v975 = vand.u32 %v577, 4294901760
    %976 = vmatpush1.msra.mxu0 %v975
    %977 = vmatprep.subr.mxu0 0.0
    %v978 = vand.u32 %v576, 4294901760
    %979 = vmatpush1.msra.mxu0 %v978
    %980 = vmatprep.subr.mxu0 0.0
    %v981 = vand.u32 %v575, 4294901760
    %982 = vmatpush1.msra.mxu0 %v981
    %983 = vmatprep.subr.mxu0 0.0
    %v984 = vand.u32 %v574, 4294901760
    %985 = vmatpush1.msra.mxu0 %v984
    %986 = vmatprep.subr.mxu0 0.0
    %v987 = vand.u32 %v573, 4294901760
    %988 = vmatpush1.msra.mxu0 %v987
    %989 = vmatprep.subr.mxu0 0.0
    %v990 = vand.u32 %v572, 4294901760
    %991 = vmatpush1.msra.mxu0 %v990
    %992 = vmatprep.subr.mxu0 0.0
    %v993 = vand.u32 %v571, 4294901760
    %994 = vmatpush1.msra.mxu0 %v993
    %995 = vmatprep.subr.mxu0 0.0
    %v996 = vand.u32 %v570, 4294901760
    %997 = vmatpush1.msra.mxu0 %v996
    %998 = vmatprep.subr.mxu0 0.0
    %v999 = vand.u32 %v569, 4294901760
    %1000 = vmatpush1.msra.mxu0 %v999
    %1001 = vmatprep.subr.mxu0 0.0
    %v1002 = vand.u32 %v568, 4294901760
    %1003 = vmatpush1.msra.mxu0 %v1002
    %1004 = vmatprep.subr.mxu0 0.0
    %v1005 = vand.u32 %v567, 4294901760
    %1006 = vmatpush1.msra.mxu0 %v1005
    %1007 = vmatprep.subr.mxu0 0.0
    %1008 = vmatpush2.msra.mxu0 0.0
    %1009 = vmatprep.subr.mxu0 0.0
    %1010 = vmatpush2.msra.mxu0 0.0
    %1011 = vmatprep.subr.mxu0 0.0
    %1012 = vmatpush2.msra.mxu0 0.0
    %1013 = vmatprep.subr.mxu0 0.0
    %1014 = vmatpush2.msra.mxu0 0.0
    %1015 = vmatprep.subr.mxu0 0.0
    %1016 = vmatpush2.msra.mxu0 0.0
    %1017 = vmatprep.subr.mxu0 0.0
    %1018 = vmatpush2.msra.mxu0 0.0
    %1019 = vmatprep.subr.mxu0 0.0
    %1020 = vmatpush2.msra.mxu0 0.0
    %1021 = vmatprep.subr.mxu0 0.0
    %1022 = vmatpush2.msra.mxu0 0.0
    %1023 = vmatprep.subr.mxu0 0.0
    %1024 = vmatpush2.msra.mxu0 0.0
    %1025 = vmatprep.subr.mxu0 0.0
    %1026 = vmatpush2.msra.mxu0 0.0
    %1027 = vmatprep.subr.mxu0 0.0
    %1028 = vmatpush2.msra.mxu0 0.0
    %1029 = vmatprep.subr.mxu0 0.0
    %1030 = vmatpush2.msra.mxu0 0.0
    %1031 = vmatprep.subr.mxu0 0.0
    %1032 = vmatpush2.msra.mxu0 0.0
    %1033 = vmatprep.subr.mxu0 0.0
    %1034 = vmatpush2.msra.mxu0 0.0
    %1035 = vmatprep.subr.mxu0 0.0
    %1036 = vmatpush2.msra.mxu0 0.0
    %1037 = vmatprep.subr.mxu0 0.0
    %1038 = vmatpush2.msra.mxu0 0.0
    %1039 = vmatprep.mubr.f32.mxu0 0.0
    %v1040 = vand.u32 %v565, 4294901760
    %v1041 = vsub.f32 %v565, %v1040
    %v1042 = vand.u32 %v1041, 4294901760
    %1043 = vmatmul.mubr.f32.gmra.mxu0 %v1042
    %v1044 = vpop.f32.mrf.mxu0
    %v1045 = vadd.f32 %v949, %v1044
    %v1046 = vpop.f32.mrf.mxu0
    %1047 = vmatprep.mubr.f32.mxu0 0.0
    %v1048 = vand.u32 %v566, 4294901760
    %v1049 = vsub.f32 %v566, %v1048
    %v1050 = vand.u32 %v1049, 4294901760
    %1051 = vmatmul.mubr.f32.gmra.mxu0 %v1050
    %v1052 = vpop.f32.mrf.mxu0
    %v1053 = vadd.f32 %v956, %v1052
    %v1054 = vpop.f32.mrf.mxu0
    %1055 = vdwg.mxu0
    %1056 = vmatprep.subr.mxu0 0.0
    %v1057 = vand.u32 %v582, 4294901760
    %v1058 = vsub.f32 %v582, %v1057
    %v1059 = vand.u32 %v1058, 4294901760
    %1060 = vmatpush1.msra.mxu0 %v1059
    %1061 = vmatprep.subr.mxu0 0.0
    %v1062 = vand.u32 %v581, 4294901760
    %v1063 = vsub.f32 %v581, %v1062
    %v1064 = vand.u32 %v1063, 4294901760
    %1065 = vmatpush1.msra.mxu0 %v1064
    %1066 = vmatprep.subr.mxu0 0.0
    %v1067 = vand.u32 %v580, 4294901760
    %v1068 = vsub.f32 %v580, %v1067
    %v1069 = vand.u32 %v1068, 4294901760
    %1070 = vmatpush1.msra.mxu0 %v1069
    %1071 = vmatprep.subr.mxu0 0.0
    %v1072 = vand.u32 %v579, 4294901760
    %v1073 = vsub.f32 %v579, %v1072
    %v1074 = vand.u32 %v1073, 4294901760
    %1075 = vmatpush1.msra.mxu0 %v1074
    %1076 = vmatprep.subr.mxu0 0.0
    %v1077 = vand.u32 %v578, 4294901760
    %v1078 = vsub.f32 %v578, %v1077
    %v1079 = vand.u32 %v1078, 4294901760
    %1080 = vmatpush1.msra.mxu0 %v1079
    %1081 = vmatprep.subr.mxu0 0.0
    %v1082 = vand.u32 %v577, 4294901760
    %v1083 = vsub.f32 %v577, %v1082
    %v1084 = vand.u32 %v1083, 4294901760
    %1085 = vmatpush1.msra.mxu0 %v1084
    %1086 = vmatprep.subr.mxu0 0.0
    %v1087 = vand.u32 %v576, 4294901760
    %v1088 = vsub.f32 %v576, %v1087
    %v1089 = vand.u32 %v1088, 4294901760
    %1090 = vmatpush1.msra.mxu0 %v1089
    %1091 = vmatprep.subr.mxu0 0.0
    %v1092 = vand.u32 %v575, 4294901760
    %v1093 = vsub.f32 %v575, %v1092
    %v1094 = vand.u32 %v1093, 4294901760
    %1095 = vmatpush1.msra.mxu0 %v1094
    %1096 = vmatprep.subr.mxu0 0.0
    %v1097 = vand.u32 %v574, 4294901760
    %v1098 = vsub.f32 %v574, %v1097
    %v1099 = vand.u32 %v1098, 4294901760
    %1100 = vmatpush1.msra.mxu0 %v1099
    %1101 = vmatprep.subr.mxu0 0.0
    %v1102 = vand.u32 %v573, 4294901760
    %v1103 = vsub.f32 %v573, %v1102
    %v1104 = vand.u32 %v1103, 4294901760
    %1105 = vmatpush1.msra.mxu0 %v1104
    %1106 = vmatprep.subr.mxu0 0.0
    %v1107 = vand.u32 %v572, 4294901760
    %v1108 = vsub.f32 %v572, %v1107
    %v1109 = vand.u32 %v1108, 4294901760
    %1110 = vmatpush1.msra.mxu0 %v1109
    %1111 = vmatprep.subr.mxu0 0.0
    %v1112 = vand.u32 %v571, 4294901760
    %v1113 = vsub.f32 %v571, %v1112
    %v1114 = vand.u32 %v1113, 4294901760
    %1115 = vmatpush1.msra.mxu0 %v1114
    %1116 = vmatprep.subr.mxu0 0.0
    %v1117 = vand.u32 %v570, 4294901760
    %v1118 = vsub.f32 %v570, %v1117
    %v1119 = vand.u32 %v1118, 4294901760
    %1120 = vmatpush1.msra.mxu0 %v1119
    %1121 = vmatprep.subr.mxu0 0.0
    %v1122 = vand.u32 %v569, 4294901760
    %v1123 = vsub.f32 %v569, %v1122
    %v1124 = vand.u32 %v1123, 4294901760
    %1125 = vmatpush1.msra.mxu0 %v1124
    %1126 = vmatprep.subr.mxu0 0.0
    %v1127 = vand.u32 %v568, 4294901760
    %v1128 = vsub.f32 %v568, %v1127
    %v1129 = vand.u32 %v1128, 4294901760
    %1130 = vmatpush1.msra.mxu0 %v1129
    %1131 = vmatprep.subr.mxu0 0.0
    %v1132 = vand.u32 %v567, 4294901760
    %v1133 = vsub.f32 %v567, %v1132
    %v1134 = vand.u32 %v1133, 4294901760
    %1135 = vmatpush1.msra.mxu0 %v1134
    %1136 = vmatprep.subr.mxu0 0.0
    %1137 = vmatpush2.msra.mxu0 0.0
    %1138 = vmatprep.subr.mxu0 0.0
    %1139 = vmatpush2.msra.mxu0 0.0
    %1140 = vmatprep.subr.mxu0 0.0
    %1141 = vmatpush2.msra.mxu0 0.0
    %1142 = vmatprep.subr.mxu0 0.0
    %1143 = vmatpush2.msra.mxu0 0.0
    %1144 = vmatprep.subr.mxu0 0.0
    %1145 = vmatpush2.msra.mxu0 0.0
    %1146 = vmatprep.subr.mxu0 0.0
    %1147 = vmatpush2.msra.mxu0 0.0
    %1148 = vmatprep.subr.mxu0 0.0
    %1149 = vmatpush2.msra.mxu0 0.0
    %1150 = vmatprep.subr.mxu0 0.0
    %1151 = vmatpush2.msra.mxu0 0.0
    %1152 = vmatprep.subr.mxu0 0.0
    %1153 = vmatpush2.msra.mxu0 0.0
    %1154 = vmatprep.subr.mxu0 0.0
    %1155 = vmatpush2.msra.mxu0 0.0
    %1156 = vmatprep.subr.mxu0 0.0
    %1157 = vmatpush2.msra.mxu0 0.0
    %1158 = vmatprep.subr.mxu0 0.0
    %1159 = vmatpush2.msra.mxu0 0.0
    %1160 = vmatprep.subr.mxu0 0.0
    %1161 = vmatpush2.msra.mxu0 0.0
    %1162 = vmatprep.subr.mxu0 0.0
    %1163 = vmatpush2.msra.mxu0 0.0
    %1164 = vmatprep.subr.mxu0 0.0
    %1165 = vmatpush2.msra.mxu0 0.0
    %1166 = vmatprep.subr.mxu0 0.0
    %1167 = vmatpush2.msra.mxu0 0.0
    %1168 = vmatprep.mubr.f32.mxu0 0.0
    %v1169 = vand.u32 %v565, 4294901760
    %1170 = vmatmul.mubr.f32.gmra.mxu0 %v1169
    %v1171 = vpop.f32.mrf.mxu0
    %v1172 = vadd.f32 %v1045, %v1171
    %v1173 = vpop.f32.mrf.mxu0
    %1174 = vmatprep.mubr.f32.mxu0 0.0
    %v1175 = vand.u32 %v566, 4294901760
    %1176 = vmatmul.mubr.f32.gmra.mxu0 %v1175
    %v1177 = vpop.f32.mrf.mxu0
    %v1178 = vadd.f32 %v1053, %v1177
    %v1179 = vpop.f32.mrf.mxu0
    %1180 = vdwg.mxu0
    %1181 = vmatprep.subr.mxu0 0.0
    %v1182 = vand.u32 %v582, 4294901760
    %1183 = vmatpush1.msra.mxu0 %v1182
    %1184 = vmatprep.subr.mxu0 0.0
    %v1185 = vand.u32 %v581, 4294901760
    %1186 = vmatpush1.msra.mxu0 %v1185
    %1187 = vmatprep.subr.mxu0 0.0
    %v1188 = vand.u32 %v580, 4294901760
    %1189 = vmatpush1.msra.mxu0 %v1188
    %1190 = vmatprep.subr.mxu0 0.0
    %v1191 = vand.u32 %v579, 4294901760
    %1192 = vmatpush1.msra.mxu0 %v1191
    %1193 = vmatprep.subr.mxu0 0.0
    %v1194 = vand.u32 %v578, 4294901760
    %1195 = vmatpush1.msra.mxu0 %v1194
    %1196 = vmatprep.subr.mxu0 0.0
    %v1197 = vand.u32 %v577, 4294901760
    %1198 = vmatpush1.msra.mxu0 %v1197
    %1199 = vmatprep.subr.mxu0 0.0
    %v1200 = vand.u32 %v576, 4294901760
    %1201 = vmatpush1.msra.mxu0 %v1200
    %1202 = vmatprep.subr.mxu0 0.0
    %v1203 = vand.u32 %v575, 4294901760
    %1204 = vmatpush1.msra.mxu0 %v1203
    %1205 = vmatprep.subr.mxu0 0.0
    %v1206 = vand.u32 %v574, 4294901760
    %1207 = vmatpush1.msra.mxu0 %v1206
    %1208 = vmatprep.subr.mxu0 0.0
    %v1209 = vand.u32 %v573, 4294901760
    %1210 = vmatpush1.msra.mxu0 %v1209
    %1211 = vmatprep.subr.mxu0 0.0
    %v1212 = vand.u32 %v572, 4294901760
    %1213 = vmatpush1.msra.mxu0 %v1212
    %1214 = vmatprep.subr.mxu0 0.0
    %v1215 = vand.u32 %v571, 4294901760
    %1216 = vmatpush1.msra.mxu0 %v1215
    %1217 = vmatprep.subr.mxu0 0.0
    %v1218 = vand.u32 %v570, 4294901760
    %1219 = vmatpush1.msra.mxu0 %v1218
    %1220 = vmatprep.subr.mxu0 0.0
    %v1221 = vand.u32 %v569, 4294901760
    %1222 = vmatpush1.msra.mxu0 %v1221
    %1223 = vmatprep.subr.mxu0 0.0
    %v1224 = vand.u32 %v568, 4294901760
    %1225 = vmatpush1.msra.mxu0 %v1224
    %1226 = vmatprep.subr.mxu0 0.0
    %v1227 = vand.u32 %v567, 4294901760
    %1228 = vmatpush1.msra.mxu0 %v1227
    %1229 = vmatprep.subr.mxu0 0.0
    %1230 = vmatpush2.msra.mxu0 0.0
    %1231 = vmatprep.subr.mxu0 0.0
    %1232 = vmatpush2.msra.mxu0 0.0
    %1233 = vmatprep.subr.mxu0 0.0
    %1234 = vmatpush2.msra.mxu0 0.0
    %1235 = vmatprep.subr.mxu0 0.0
    %1236 = vmatpush2.msra.mxu0 0.0
    %1237 = vmatprep.subr.mxu0 0.0
    %1238 = vmatpush2.msra.mxu0 0.0
    %1239 = vmatprep.subr.mxu0 0.0
    %1240 = vmatpush2.msra.mxu0 0.0
    %1241 = vmatprep.subr.mxu0 0.0
    %1242 = vmatpush2.msra.mxu0 0.0
    %1243 = vmatprep.subr.mxu0 0.0
    %1244 = vmatpush2.msra.mxu0 0.0
    %1245 = vmatprep.subr.mxu0 0.0
    %1246 = vmatpush2.msra.mxu0 0.0
    %1247 = vmatprep.subr.mxu0 0.0
    %1248 = vmatpush2.msra.mxu0 0.0
    %1249 = vmatprep.subr.mxu0 0.0
    %1250 = vmatpush2.msra.mxu0 0.0
    %1251 = vmatprep.subr.mxu0 0.0
    %1252 = vmatpush2.msra.mxu0 0.0
    %1253 = vmatprep.subr.mxu0 0.0
    %1254 = vmatpush2.msra.mxu0 0.0
    %1255 = vmatprep.subr.mxu0 0.0
    %1256 = vmatpush2.msra.mxu0 0.0
    %1257 = vmatprep.subr.mxu0 0.0
    %1258 = vmatpush2.msra.mxu0 0.0
    %1259 = vmatprep.subr.mxu0 0.0
    %1260 = vmatpush2.msra.mxu0 0.0
    %1261 = vmatprep.mubr.f32.mxu0 0.0
    %v1262 = vand.u32 %v565, 4294901760
    %1263 = vmatmul.mubr.f32.gmra.mxu0 %v1262
    %v1264 = vpop.f32.mrf.mxu0
    %v1265 = vadd.f32 %v1172, %v1264
    %v1266 = vpop.f32.mrf.mxu0
    %1267 = vmatprep.mubr.f32.mxu0 0.0
    %v1268 = vand.u32 %v566, 4294901760
    %1269 = vmatmul.mubr.f32.gmra.mxu0 %v1268
    %v1270 = vpop.f32.mrf.mxu0
    %v1271 = vadd.f32 %v1178, %v1270
    %v1272 = vpop.f32.mrf.mxu0
    %1273 = vdwg.mxu0
    %vm1274 = vcmask 261120
    %1275 = vst.msk [vmem:[#allocation3] sm:$0xff] %vm1274, %v1265
    %1276 = vst.msk [vmem:[#allocation3 + $0x8] sm:$0xff] %vm1274, %v1271
    // Predicated region
    $region22: #{tpu_custom_call.1} parent=1 // pred_check
      _
    $region23: #{tpu_custom_call.1} parent=1 // pred_check_branch
      %1278 = sbr.rel (0) target = $region25
    $region24: #{tpu_custom_call.1} parent=1 // pred_region
      %s1280 = ssub.s32 256, 256
      %1281 = vsyncadd [#allocation4], %s1280
      %s1282 = sshll.u32 [#allocation3], 4
      %s1283 = int_to_ptr.vmem [resolvable:$true] %s1282
      %1288 = dma.vmem_to_hbm [thread:$0]  %s1283, 256, %s4, [#allocation4], 128, 128, 8
    $region25: #{tpu_custom_call.1} parent=1 // pred_fallthru
      _
    // Predicated region
    $region26: #{tpu_custom_call.1} parent=1 // pred_check
      _
    $region27: #{tpu_custom_call.1} parent=1 // pred_check_branch
      %1290 = sbr.rel (0) target = $region29
    $region28: #{tpu_custom_call.1} parent=1 // pred_region
      %1291 = dma.done [#allocation4], 256
    $region29: #{tpu_custom_call.1} parent=1 // pred_fallthru
      _
    %1292 = vsyncpa [#allocation4], 1

</llo_original>
